<compile_context>
chip_gen: v6e
topology: v6e:2x2x1
jax: 0.10.0
libtpu: 0.0.40
codegen_flags: <defaults>
</compile_context>

<pallas_src>
import functools

import jax
import jax.numpy as jnp
from jax.experimental import pallas as pl
from jax.experimental.pallas import tpu as pltpu


# -----------------------------------------------------------------------------
# Backward Pallas kernel: o = lambda * g   (elementwise, memory-bound)
# -----------------------------------------------------------------------------
def _scale_kernel(lam_ref, g_ref, o_ref):
    # Multiply in f32 for exactness regardless of gradient dtype.
    o_ref[...] = (g_ref[...].astype(jnp.float32) * lam_ref[0]).astype(o_ref.dtype)


_LANE_CANDIDATES = (1024, 512, 256, 128)   # lane-dense widths (multiples of 128)
_MAX_TILE_ROWS = 512                       # 512 x 1024 x 4B = 2 MiB/tile -> fits
                                           # every generation's scoped VMEM with
                                           # double-buffered in+out buffers.


def _scale_grad(g, lambda_):
    """Compute lambda_ * g with a tiled, lane-dense Pallas kernel."""
    total = g.size
    lane = next((l for l in _LANE_CANDIDATES if total % l == 0), None)
    if lane is None or total < 8 * 128:
        # Ragged or tiny cotangent: plain JAX fused multiply is already at
        # roofline and avoids kernel-launch overhead.
        # TODO(synk): pad-and-mask Pallas path for ragged sizes if ever needed.
        return (g.astype(jnp.float32) * jnp.float32(lambda_)).astype(g.dtype)

    rows = total // lane
    g2d = g.reshape(rows, lane)
    tile_rows = min(_MAX_TILE_ROWS, rows)     # == rows (full dim) when small
    grid = pl.cdiv(rows, tile_rows)
    lam = jnp.asarray(lambda_, dtype=jnp.float32).reshape((1,))

    out2d = pl.pallas_call(
        _scale_kernel,
        out_shape=jax.ShapeDtypeStruct(g2d.shape, g2d.dtype),
        grid_spec=pltpu.PrefetchScalarGridSpec(
            num_scalar_prefetch=0,
            grid=(grid,),
            in_specs=[
                pl.BlockSpec(memory_space=pltpu.SMEM),            # lambda scalar
                pl.BlockSpec((tile_rows, lane), lambda i: (i, 0)),  # gradient tile
            ],
            out_specs=pl.BlockSpec((tile_rows, lane), lambda i: (i, 0)),
        ),
        input_output_aliases={1: 0},  # donate the cotangent buffer in-place
        compiler_params=pltpu.CompilerParams(
            dimension_semantics=("parallel",)),
    )(lam, g2d)
    return out2d.reshape(g.shape)


# -----------------------------------------------------------------------------
# custom_vjp: identity forward, lambda-scaled backward
# -----------------------------------------------------------------------------
@functools.partial(jax.custom_vjp, nondiff_argnums=(1,))
def grad_scale(x, lambda_=1.0):
    """GradScale.forward: identity on x; gradient scaled by lambda_ in bwd."""
    # PyTorch's x.view_as(x) is zero-copy -> return x unchanged (no HBM traffic).
    return x


def _grad_scale_fwd(x, lambda_):
    return x, None


def _grad_scale_bwd(lambda_, _, g):
    return (_scale_grad(g, lambda_),)


grad_scale.defvjp(_grad_scale_fwd, _grad_scale_bwd)


class GradScale:
    """Minimal JAX counterpart of the PyTorch GradScale module."""

    def __init__(self, lambda_=1.0):
        self.lambda_ = float(lambda_)

    def set_lambda(self, lambda_):
        self.lambda_ = float(lambda_)

    def __call__(self, x):
        return grad_scale(x, self.lambda_)


if __name__ == "__main__":
    key = jax.random.PRNGKey(0)

    # NCHW, consistent with the PyTorch conv-feature usage.
    x = jax.random.normal(key, (2, 4, 16, 16), dtype=jnp.float32)

    mod = GradScale(lambda_=0.5)

    # Forward must be an exact identity (zero-copy).
    y = jax.block_until_ready(mod(x))
    assert y.shape == x.shape and y.dtype == x.dtype
    assert bool(jnp.all(y == x))

    # Backward: grad of sum(y) w.r.t. x is lambda_ * ones (runs the Pallas
    # scale kernel; 2048 elements -> one (2, 1024) lane-dense tile).
    g = jax.block_until_ready(jax.grad(lambda a: jnp.sum(mod(a)))(x))
    assert bool(jnp.allclose(g, 0.5 * jnp.ones_like(x)))

    # Exercise the multi-tile grid path (rows > tile_rows) with a moderately
    # larger cotangent: 2*16*128*256 = 1,048,576 elems -> (1024, 1024), grid=2.
    x2 = jax.random.normal(key, (2, 16, 128, 256), dtype=jnp.float32)
    g2 = jax.block_until_ready(jax.grad(lambda a: jnp.sum(grad_scale(a, 0.25)))(x2))
    assert bool(jnp.allclose(g2, 0.25 * jnp.ones_like(x2)))

    # bf16 gradient path (f32 multiply inside the kernel, cast back to bf16).
    x3 = jax.random.normal(key, (2, 4, 16, 16), dtype=jnp.bfloat16)
    g3 = jax.block_until_ready(jax.grad(
        lambda a: jnp.sum(grad_scale(a, 0.5).astype(jnp.float32)))(x3))
    assert g3.dtype == jnp.bfloat16
    assert bool(jnp.allclose(g3.astype(jnp.float32), 0.5, atol=1e-2))

    print("KERNEL_OK")
</pallas_src>

<mosaic_0001>
module attributes {stable_mosaic.version = 11 : i64} {
  func.func @_scale_kernel(%arg0: i32, %arg1: memref<1xf32, #tpu.memory_space<smem>>, %arg2: memref<2x1024xf32, #tpu.memory_space<vmem>>, %arg3: memref<2x1024xf32, #tpu.memory_space<vmem>>) attributes {dimension_semantics = [#tpu.dimension_semantics<parallel>], iteration_bounds = array<i64: 1>, scalar_prefetch = 0 : i64, scratch_operands = 0 : i64, tpu.core_type = #tpu.core_type<tc>, window_params = [{transform_indices = @transform_0, window_bounds = array<i64: 1>}, {transform_indices = @transform_1, window_bounds = array<i64: 2, 1024>}, {transform_indices = @transform_2, window_bounds = array<i64: 2, 1024>}]} {
    %c0 = arith.constant 0 : index
    %c0_0 = arith.constant 0 : index
    %0 = vector.load %arg2[%c0, %c0_0] : memref<2x1024xf32, #tpu.memory_space<vmem>>, vector<2x1024xf32>
    %c0_1 = arith.constant 0 : index
    %1 = memref.load %arg1[%c0_1] : memref<1xf32, #tpu.memory_space<smem>>
    %2 = vector.broadcast %1 : f32 to vector<2x1024xf32>
    %3 = arith.mulf %0, %2 : vector<2x1024xf32>
    %c0_2 = arith.constant 0 : index
    %c0_3 = arith.constant 0 : index
    %4 = vector.load %arg3[%c0_2, %c0_3] : memref<2x1024xf32, #tpu.memory_space<vmem>>, vector<2x1024xf32>
    tpu.vector_store %arg3[%c0_2, %c0_3], %3 {strides = array<i32>} : memref<2x1024xf32, #tpu.memory_space<vmem>>, vector<2x1024xf32>,
    return
  }
  func.func @transform_0(%arg0: i32) -> i32 {
    %c0_i32 = arith.constant 0 : i32
    %c0_i32_0 = arith.constant 0 : i32
    return %c0_i32 : i32
  }
  func.func @transform_1(%arg0: i32) -> (i32, i32) {
    %c0_i32 = arith.constant 0 : i32
    %c0_i32_0 = arith.constant 0 : i32
    return %arg0, %c0_i32 : i32, i32
  }
  func.func @transform_2(%arg0: i32) -> (i32, i32) {
    %c0_i32 = arith.constant 0 : i32
    %c0_i32_0 = arith.constant 0 : i32
    return %arg0, %c0_i32 : i32, i32
  }
}

</mosaic_0001>

<llo_original>
// kernel: tpu_custom_call.1
$region0: #{tpu_custom_call.1}
  #allocation0 [shape = 'u32[]', space=smem, size = 0x4, offset = 0x4, fixed_abs, tag = 'smem constant byte address 0x4 - core index']
  #allocation1 [shape = 'u32[144,128]{1,0:T(1,128)}', space=vmem, size = 0x12000, scoped, tag = 'internal scratch']
  #allocation2 [shape = 'f32[1]{0:T(128)S(6)}', space=smem, size = 0x200, scoped, tag = 'scoped memory for tpu_custom_call.1']
  %s0 = inlined_call_operand.<no memory space> [shape: f32[1], index: 0, kind: input, shape index: {}]
  %s1 = inlined_call_operand.hbm [shape: f32[2,1024], index: 1, kind: input, shape index: {}, may-alias: {1,2}]
  %s2 = inlined_call_operand.hbm [shape: f32[2,1024], index: 2, kind: output, shape index: {}, may-alias: {1,2}]
  %s3 = sld [smem:[#allocation0]]
  $region22: #{tpu_custom_call.1} parent=0
    _
  %s5 = ssub.s32 1, %s3
  %s6 = scalar_select 0, %s5, %s3
  %7 = sst [smem:[#allocation2]] %s0
  $region1: #{tpu_custom_call.1} parent=0
    #allocation3 [shape = 'u8[8192]{0}', space=vmem, size = 0x2000, scoped, tag = 'input window, operand 1, single buffered']
    #allocation4 [shape = 's32[1]{0}', space=sflag, size = 0x4, scoped, tag = 'scoped memory for tpu_custom_call.1']
    #allocation5 [shape = 's32[1]{0}', space=sflag, size = 0x4, scoped, tag = 'scoped memory for tpu_custom_call.1']
    #allocation6 [shape = 'u8[8192]{0}', space=vmem, size = 0x2000, scoped, tag = 'output window, operand 0, single buffered']
    %8 = vsyncpa [#allocation4], 0
    %9 = vsyncpa [#allocation5], 0
    // Predicated region
    $region2: #{tpu_custom_call.1} parent=1 // pred_check
      _
    $region3: #{tpu_custom_call.1} parent=1 // pred_check_branch
      %11 = sbr.rel (0) target = $region5
    $region4: #{tpu_custom_call.1} parent=1 // pred_region
      _
    $region5: #{tpu_custom_call.1} parent=1 // pred_fallthru
      _
    // Predicated region
    $region6: #{tpu_custom_call.1} parent=1 // pred_check
      _
    $region7: #{tpu_custom_call.1} parent=1 // pred_check_branch
      %13 = sbr.rel (0) target = $region9
    $region8: #{tpu_custom_call.1} parent=1 // pred_region
      %s15 = ssub.s32 256, 256
      %16 = vsyncadd [#allocation4], %s15
      %s18 = sshll.u32 [#allocation3], 4
      %s19 = int_to_ptr.vmem [resolvable:$true] %s18
      %21 = dma.hbm_to_vmem [thread:$0]  %s1, 256, %s19, [#allocation4]
    $region9: #{tpu_custom_call.1} parent=1 // pred_fallthru
      _
    // Predicated region
    $region10: #{tpu_custom_call.1} parent=1 // pred_check
      _
    $region11: #{tpu_custom_call.1} parent=1 // pred_check_branch
      %23 = sbr.rel (0) target = $region13
    $region12: #{tpu_custom_call.1} parent=1 // pred_region
      %24 = dma.done [#allocation4], 256
    $region13: #{tpu_custom_call.1} parent=1 // pred_fallthru
      _
    %v25 = vld [vmem:[#allocation3] sm:$0xff]
    %v26 = vld [vmem:[#allocation3 + $0x8] sm:$0xff]
    %s27 = sld [smem:[#allocation2]]
    %v28 = vstv %s27
    %v29 = vmul.f32 %v25, %v28
    %v30 = vmul.f32 %v26, %v28
    %31 = vst [vmem:[#allocation6] sm:$0xff] %v29
    %32 = vst [vmem:[#allocation6 + $0x8] sm:$0xff] %v30
    // Predicated region
    $region14: #{tpu_custom_call.1} parent=1 // pred_check
      _
    $region15: #{tpu_custom_call.1} parent=1 // pred_check_branch
      %34 = sbr.rel (0) target = $region17
    $region16: #{tpu_custom_call.1} parent=1 // pred_region
      %s36 = ssub.s32 256, 256
      %37 = vsyncadd [#allocation5], %s36
      %s39 = sshll.u32 [#allocation6], 4
      %s40 = int_to_ptr.vmem [resolvable:$true] %s39
      %42 = dma.vmem_to_hbm [thread:$0]  %s40, 256, %s2, [#allocation5]
    $region17: #{tpu_custom_call.1} parent=1 // pred_fallthru
      _
    // Predicated region
    $region18: #{tpu_custom_call.1} parent=1 // pred_check
      _
    $region19: #{tpu_custom_call.1} parent=1 // pred_check_branch
      %44 = sbr.rel (0) target = $region21
    $region20: #{tpu_custom_call.1} parent=1 // pred_region
      %45 = dma.done [#allocation5], 256
    $region21: #{tpu_custom_call.1} parent=1 // pred_fallthru
      _
    %46 = vsyncpa [#allocation4], 1
    %47 = vsyncpa [#allocation5], 1

</llo_original>
